<compile_context>
chip_gen: v5e
topology: v5e:2x2
jax: 0.10.0
libtpu: 0.0.40
codegen_flags: <defaults>
</compile_context>

<pallas_src>
import math
import functools

import jax
import jax.numpy as jnp
from jax import lax
from jax.experimental import pallas as pl
from jax.experimental.pallas import tpu as pltpu


def _round_up(x, m):
    return ((x + m - 1) // m) * m


def _student_rf_kernel(x_ref, w_ref, o_ref, *, p_total, tile_k, ragged,
                       compute_dtype):
    """Grid step (batch block b, reduction block k).

    x_ref: (TB, TK)  input tile
    w_ref: (K, TK)   pre-scaled weight tile (lane-dense (K, P) layout, no .T)
    o_ref: (TB, K)   f32 output tile, resident across the reduction axis
    """
    k = pl.program_id(1)

    x = x_ref[...]
    w = w_ref[...]

    if ragged:
        # Zero the out-of-range tail columns of the last reduction block
        # (their VMEM contents are undefined).  The bound is written so the
        # mask is all-True on every non-final block; cost is a few VPU selects
        # per block, negligible vs. the tile DMA.
        col = lax.broadcasted_iota(jnp.int32, (1, tile_k), 1)
        valid = col < (p_total - k * tile_k)
        x = jnp.where(valid, x, jnp.zeros_like(x))
        w = jnp.where(valid, w, jnp.zeros_like(w))

    x = x.astype(compute_dtype)
    w = w.astype(compute_dtype)

    # (TB, TK) . (K, TK) contracted over the lane axis of both operands
    # -> (TB, K); no transposed weight tile is ever materialized.
    # TODO(synk): at this extreme 8x12-output shape a VPU broadcast-MAC
    # (stride-0 sublane broadcast of each W row + lane reduce) may beat the
    # MXU weight-load cadence; verify on a bundle dump before switching.
    partial = lax.dot_general(
        x, w,
        dimension_numbers=(((1,), (1,)), ((), ())),
        preferred_element_type=jnp.float32,
    )

    @pl.when(k == 0)
    def _():
        o_ref[...] = jnp.zeros_like(o_ref)

    o_ref[...] += partial


def _vmem_capacity_bytes():
    try:
        cap = getattr(pltpu.get_tpu_info(), "vmem_capacity_bytes", None)
        if cap:
            return int(cap)
    except Exception:
        pass
    return 64 << 20  # conservative: v7x per-TensorCore VMEM


def _pick_tile_b(B):
    """Batch tile: a multiple of 8 (or the full batch; full-extent blocks are
    legal).  Prefer >= 2 blocks so both v7x TensorCores get work; never pad x
    (a ragged last batch block only produces dropped out-of-bounds rows)."""
    if B <= 8:
        return B
    if B % 16 == 0:
        return min(128, B // 2)
    if B % 8 == 0:
        return min(128, max(8, (B // 2) // 8 * 8))
    return B if B <= 128 else 128


def _select_tiles(B, P, K, x_itemsize, w_itemsize, vmem_cap, tile_k_cols):
    tile_b = _pick_tile_b(B)
    p_lane = _round_up(P, 128)

    if tile_k_cols is not None:
        tile_k = min(p_lane, max(128, _round_up(tile_k_cols, 128)))
    else:
        # Double-buffered x + W blocks must fit the VMEM budget (account for
        # sublane padding: K=12 -> 16 weight rows, tile_b -> multiple of 8).
        input_budget = min(24 << 20, vmem_cap // 2)
        row_x = _round_up(tile_b, 8)
        row_w = _round_up(K, 8)
        per_col = 2 * (row_x * x_itemsize + row_w * w_itemsize)
        max_tile_k = max(128, (input_budget // per_col) // 128 * 128)
        # A handful of reduction steps (not one giant block) so the pipeline
        # overlaps DMA with compute; ~16K columns per step is plenty.
        tile_k = min(p_lane, max_tile_k, 16384)
        # Rebalance so k-steps are evenly sized (no mostly-empty tail block).
        n_k = -(-P // tile_k)
        tile_k = min(tile_k, _round_up(-(-p_lane // n_k), 128))

    n_k = -(-P // tile_k)
    return tile_b, tile_k, n_k


def make_student_rf_params(key, K, N, *, param_dtype=jnp.bfloat16):
    """Student_RF.fc1 weight ~ N(0, 0.01) with the forward pass's 1/sqrt(P)
    scale folded in once here (so the kernel needs no epilogue) and optionally
    stored in bf16 (halves the dominant HBM traffic of the forward)."""
    w = 0.01 * jax.random.normal(key, (K, N), dtype=jnp.float32)
    return (w / math.sqrt(N)).astype(param_dtype)


def student_rf_forward(x, w, *, compute_dtype=jnp.bfloat16, tile_k_cols=None):
    """y = x @ w.T  where `w` is the pre-scaled fc1 weight (weight / sqrt(P)).

    Combined with make_student_rf_params this reproduces
    Student_RF.forward(x) = (x @ weight.T) / sqrt(P) with identity activation.
    x: (B, P); w: (K, P).  Returns (B, K) float32.
    Set compute_dtype=jnp.float32 (and f32 weights) for a full-f32 match.
    """
    B, P = x.shape
    K, P2 = w.shape
    assert P == P2, "feature dims must match"

    x_itemsize = jnp.dtype(x.dtype).itemsize
    w_itemsize = jnp.dtype(w.dtype).itemsize

    vmem_cap = _vmem_capacity_bytes()
    tile_b, tile_k, n_k = _select_tiles(B, P, K, x_itemsize, w_itemsize,
                                        vmem_cap, tile_k_cols)
    n_b = -(-B // tile_b)
    ragged = (P % tile_k) != 0

    # Explicit scoped-VMEM limit sized to the real double-buffered footprint
    # (+ headroom for compiler-internal scratch), capped below physical VMEM.
    row_x = _round_up(tile_b, 8)
    row_w = _round_up(K, 8)
    footprint = (2 * tile_k * (row_x * x_itemsize + row_w * w_itemsize)
                 + 2 * row_x * _round_up(K, 128) * 4)
    vmem_limit = max(16 << 20, min(vmem_cap - (8 << 20), footprint + (4 << 20)))

    kernel = functools.partial(
        _student_rf_kernel,
        p_total=P, tile_k=tile_k, ragged=ragged, compute_dtype=compute_dtype)

    return pl.pallas_call(
        kernel,
        out_shape=jax.ShapeDtypeStruct((B, K), jnp.float32),
        grid_spec=pltpu.PrefetchScalarGridSpec(
            num_scalar_prefetch=0,
            grid=(n_b, n_k),
            in_specs=[
                # x tile: one batch block, one feature chunk
                pl.BlockSpec((tile_b, tile_k), lambda b, k: (b, k)),
                # w tile: all K outputs, same feature chunk.
                # TODO(synk): for B >> 128 keep W fully VMEM-resident
                # (index_map (0, 0) + in-kernel pl.ds slicing) so it is not
                # re-fetched once per batch block.
                pl.BlockSpec((K, tile_k), lambda b, k: (0, k)),
            ],
            # Output block resident across the reduction axis (accumulator).
            out_specs=pl.BlockSpec((tile_b, K), lambda b, k: (b, 0)),
        ),
        compiler_params=pltpu.CompilerParams(
            dimension_semantics=("parallel", "arbitrary"),
            vmem_limit_bytes=int(vmem_limit),
        ),
    )(x, w)


if __name__ == "__main__":
    # Small shapes consistent with the module: K=12 outputs, P input features
    # (deliberately NOT a multiple of 128 to exercise the ragged-tail mask),
    # batch of 16 (two 8-row blocks -> exercises the parallel batch axis).
    K_OUT = 12
    P_IN = 500       # stands in for N = 50000 at small scale
    BATCH = 16

    key = jax.random.PRNGKey(0)
    kx, kw = jax.random.split(key)

    x = jax.random.normal(kx, (BATCH, P_IN), dtype=jnp.float32)
    # Parameter init mirroring nn.init.normal_(weight, std=0.01), with the
    # 1/sqrt(P) forward-scale folded in and stored bf16 (streaming path).
    w = make_student_rf_params(kw, K_OUT, P_IN, param_dtype=jnp.bfloat16)

    # tile_k=256 -> 2 reduction steps: exercises accumulation across k and the
    # ragged-tail mask (500 = 256 + 244 valid columns in the last block).
    y = student_rf_forward(x, w, tile_k_cols=256)
    y = jax.block_until_ready(y)

    # Reference with identical input rounding (bf16 operands, f32 accumulate).
    xr = x.astype(jnp.bfloat16).astype(jnp.float32)
    wr = w.astype(jnp.float32)
    y_ref = xr @ wr.T

    assert y.shape == (BATCH, K_OUT)
    assert jnp.allclose(y, y_ref, atol=1e-5, rtol=1e-4), (
        float(jnp.max(jnp.abs(y - y_ref))))

    print("KERNEL_OK")
</pallas_src>

<mosaic_0001>
module attributes {stable_mosaic.version = 11 : i64} {
  func.func @_student_rf_kernel(%arg0: i32, %arg1: i32, %arg2: memref<8x256xf32, #tpu.memory_space<vmem>>, %arg3: memref<12x256xbf16, #tpu.memory_space<vmem>>, %arg4: memref<8x12xf32, #tpu.memory_space<vmem>>) attributes {dimension_semantics = [#tpu.dimension_semantics<parallel>, #tpu.dimension_semantics<arbitrary>], iteration_bounds = array<i64: 2, 2>, scalar_prefetch = 0 : i64, scratch_operands = 0 : i64, tpu.core_type = #tpu.core_type<tc>, window_params = [{transform_indices = @transform_0, window_bounds = array<i64: 8, 256>}, {transform_indices = @transform_1, window_bounds = array<i64: 12, 256>}, {transform_indices = @transform_2, window_bounds = array<i64: 8, 12>}]} {
    %c0 = arith.constant 0 : index
    %c0_0 = arith.constant 0 : index
    %0 = vector.load %arg2[%c0, %c0_0] : memref<8x256xf32, #tpu.memory_space<vmem>>, vector<8x256xf32>
    %c0_1 = arith.constant 0 : index
    %c0_2 = arith.constant 0 : index
    %1 = vector.load %arg3[%c0_1, %c0_2] : memref<12x256xbf16, #tpu.memory_space<vmem>>, vector<12x256xbf16>
    %2 = tpu.iota {dimensions = array<i32: 1>} : vector<1x256xi32>
    %c256_i32 = arith.constant 256 : i32
    %3 = arith.muli %arg1, %c256_i32 : i32
    %c500_i32 = arith.constant 500 : i32
    %4 = arith.subi %c500_i32, %3 : i32
    %5 = vector.broadcast %4 : i32 to vector<1x256xi32>
    %6 = arith.cmpi slt, %2, %5 : vector<1x256xi32>
    %cst = arith.constant 0.000000e+00 : f32
    %7 = vector.broadcast %cst : f32 to vector<8x256xf32>
    %8 = vector.shape_cast %6 : vector<1x256xi1> to vector<1x256xi1>
    %9 = vector.broadcast %8 : vector<1x256xi1> to vector<8x256xi1>
    %10 = arith.select %9, %0, %7 : vector<8x256xi1>, vector<8x256xf32>
    %cst_3 = arith.constant 0.000000e+00 : bf16
    %11 = vector.broadcast %cst_3 : bf16 to vector<12x256xbf16>
    %12 = vector.shape_cast %6 : vector<1x256xi1> to vector<1x256xi1>
    %13 = vector.broadcast %12 : vector<1x256xi1> to vector<12x256xi1>
    %14 = arith.select %13, %1, %11 : vector<12x256xi1>, vector<12x256xbf16>
    %15 = arith.truncf %10 : vector<8x256xf32> to vector<8x256xbf16>
    %cst_4 = arith.constant dense<0.000000e+00> : vector<8x12xf32>
    %16 = tpu.matmul %15, %14, %cst_4 {dimension_numbers = #tpu.dot_dimension_numbers<[1], [1], [0], [0], [0, 0, 1, 0], [], []>} : vector<8x256xbf16>, vector<12x256xbf16>, vector<8x12xf32> -> vector<8x12xf32>
    %c0_i32 = arith.constant 0 : i32
    %17 = arith.cmpi eq, %arg1, %c0_i32 : i32
    %18 = arith.extui %17 : i1 to i32
    %c0_i32_5 = arith.constant 0 : i32
    %19 = arith.cmpi ne, %18, %c0_i32_5 : i32
    scf.if %19 {
      %cst_10 = arith.constant 0.000000e+00 : f32
      %23 = vector.broadcast %cst_10 : f32 to vector<8x12xf32>
      %c0_11 = arith.constant 0 : index
      %c0_12 = arith.constant 0 : index
      %24 = vector.load %arg4[%c0_11, %c0_12] : memref<8x12xf32, #tpu.memory_space<vmem>>, vector<8x12xf32>
      tpu.vector_store %arg4[%c0_11, %c0_12], %23 {strides = array<i32>} : memref<8x12xf32, #tpu.memory_space<vmem>>, vector<8x12xf32>,
    } else {
    }
    %c0_6 = arith.constant 0 : index
    %c0_7 = arith.constant 0 : index
    %20 = vector.load %arg4[%c0_6, %c0_7] : memref<8x12xf32, #tpu.memory_space<vmem>>, vector<8x12xf32>
    %21 = arith.addf %20, %16 : vector<8x12xf32>
    %c0_8 = arith.constant 0 : index
    %c0_9 = arith.constant 0 : index
    %22 = vector.load %arg4[%c0_8, %c0_9] : memref<8x12xf32, #tpu.memory_space<vmem>>, vector<8x12xf32>
    tpu.vector_store %arg4[%c0_8, %c0_9], %21 {strides = array<i32>} : memref<8x12xf32, #tpu.memory_space<vmem>>, vector<8x12xf32>,
    return
  }
  func.func @transform_0(%arg0: i32, %arg1: i32) -> (i32, i32) {
    %c0_i32 = arith.constant 0 : i32
    return %arg0, %arg1 : i32, i32
  }
  func.func @transform_1(%arg0: i32, %arg1: i32) -> (i32, i32) {
    %c0_i32 = arith.constant 0 : i32
    %c0_i32_0 = arith.constant 0 : i32
    return %c0_i32, %arg1 : i32, i32
  }
  func.func @transform_2(%arg0: i32, %arg1: i32) -> (i32, i32) {
    %c0_i32 = arith.constant 0 : i32
    %c0_i32_0 = arith.constant 0 : i32
    return %arg0, %c0_i32 : i32, i32
  }
}

</mosaic_0001>

<llo_original>
// kernel: tpu_custom_call.1
$region0: #{tpu_custom_call.1}
  #allocation0 [shape = 'u32[]', space=smem, size = 0x4, offset = 0x4, fixed_abs, tag = 'smem constant byte address 0x4 - core index']
  #allocation1 [shape = 'u32[72,128]{1,0:T(1,128)}', space=vmem, size = 0x9000, scoped, tag = 'internal scratch']
  %s0 = inlined_call_operand.hbm [shape: f32[16,500], index: 0, kind: input, shape index: {}]
  %s1 = inlined_call_operand.hbm [shape: bf16[12,500], index: 1, kind: input, shape index: {}]
  %s2 = inlined_call_operand.hbm [shape: f32[16,12], index: 2, kind: output, shape index: {}]
  %s3 = sld [smem:[#allocation0]]
  $region53: #{tpu_custom_call.1} parent=0
    _
  %s5 = ssub.s32 1, %s3
  %s6 = scalar_select 0, %s5, %s3
  $region1: #{tpu_custom_call.1} parent=0
    #allocation2 [shape = 'u8[16384]{0}', space=vmem, size = 0x4000, scoped, tag = 'input window, operand 0']
    #allocation3 [shape = 's32[2]{0}', space=sflag, size = 0x8, scoped, tag = 'scoped memory for tpu_custom_call.1']
    #allocation4 [shape = 's32[2]{0}', space=sflag, size = 0x8, scoped, tag = 'scoped memory for tpu_custom_call.1']
    #allocation5 [shape = 'u8[16384]{0}', space=vmem, size = 0x4000, scoped, tag = 'input window, operand 1']
    #allocation6 [shape = 's32[2]{0}', space=sflag, size = 0x8, scoped, tag = 'scoped memory for tpu_custom_call.1']
    #allocation7 [shape = 'u8[8192]{0}', space=vmem, size = 0x2000, scoped, tag = 'output window, operand 0']
    %7 = vsyncpa [#allocation3], 0
    %s8 = scalar_lea.sflag [#allocation3], 1
    %9 = vsyncpa %s8, 0
    %10 = vsyncpa [#allocation6], 0
    %s11 = scalar_lea.sflag [#allocation6], 1
    %12 = vsyncpa %s11, 0
    %13 = vsyncpa [#allocation4], 0
    %s14 = scalar_lea.sflag [#allocation4], 1
    %15 = vsyncpa %s14, 0
    loop: start=0, step=1, limit=6
    $region2: #{tpu_custom_call.1} parent=1 // loop_pre_header
      _
    $region3: #{tpu_custom_call.1} parent=1 // loop_header
      %s17 = sphi 0, %s21
      %p18 = scmp.ge.s32.totalorder %s17, 6
      %s24 = sphi 0, %s36
      %s25 = sphi 0, %s32
      %s26 = sphi 0, %s24
      %s27 = sphi 0, %s25
      %s28 = sphi 0, %s26
      %s29 = sphi 0, %s27
      %s41 = sphi 0, %s43
      %s44 = sphi 0, %s41
      %s45 = sphi 0, %s44
      %s61 = sphi 0, %s45
      %s67 = sphi 0, %s69
      %s70 = sphi 0, %s67
      %s71 = sphi 0, %s70
      %s87 = sphi 0, %s71
      %s93 = sphi 0, %s95
      %s96 = sphi 0, %s93
      %s97 = sphi 0, %s96
      %s113 = sphi 0, %s97
    $region4: #{tpu_custom_call.1} parent=1 // loop_header_branch
      %20 = sbr.rel (%p18) target = $region8
    $region5: #{tpu_custom_call.1} parent=1 // loop_body
      %s22 = ssub.s32 %s17, 1
      %s23 = ssub.s32 %s17, 2
      %s30 = sadd.s32 1, %s25
      %p31 = scmp.ge.s32.totalorder %s30, 2
      %s32 = scalar_select %p31, 0, %s30
      %s33 = sadd.s32 1, %s24
      %s34 = scalar_select %p31, %s33, %s24
      %p35 = scmp.ge.s32.totalorder %s34, 2
      %s36 = scalar_select %p35, 0, %s34
      %s37 = ssub.s32 %s24, %s36
      %s38 = ssub.s32 %s25, %s32
      %s39 = sor.u32 %s37, %s38
      %p40 = scmp.eq.s32.totalorder %s39, 0
      %s42 = sadd.s32 %s41, 1
      %s43 = scalar_select %p40, %s41, %s42
      %p46 = pneg %p40
      %p47 = scmp.eq.s32.totalorder %s17, 3
      %p48 = por %p46, %p47
      %p49 = scmp.ne.s32.totalorder %s41, %s44
      %p50 = scmp.eq.s32.totalorder %s17, 0
      %p51 = por %p49, %p50
      %p52 = scmp.ne.s32.totalorder %s41, %s44
      %p53 = scmp.eq.s32.totalorder %s22, 3
      %p54 = por %p52, %p53
      %p55 = scmp.ne.s32.totalorder %s44, %s45
      %p56 = scmp.eq.s32.totalorder %s22, 0
      %p57 = por %p55, %p56
      %p58 = scmp.ne.s32.totalorder %s44, %s45
      %p59 = scmp.eq.s32.totalorder %s23, 3
      %p60 = por %p58, %p59
      %p62 = scmp.ne.s32.totalorder %s45, %s61
      %p63 = scmp.eq.s32.totalorder %s23, 0
      %p64 = por %p62, %p63
      %s65 = ssub.s32 %s25, %s32
      %p66 = scmp.eq.s32.totalorder %s65, 0
      %s68 = sadd.s32 %s67, 1
      %s69 = scalar_select %p66, %s67, %s68
      %p72 = pneg %p66
      %p73 = scmp.eq.s32.totalorder %s17, 3
      %p74 = por %p72, %p73
      %p75 = scmp.ne.s32.totalorder %s67, %s70
      %p76 = scmp.eq.s32.totalorder %s17, 0
      %p77 = por %p75, %p76
      %p78 = scmp.ne.s32.totalorder %s67, %s70
      %p79 = scmp.eq.s32.totalorder %s22, 3
      %p80 = por %p78, %p79
      %p81 = scmp.ne.s32.totalorder %s70, %s71
      %p82 = scmp.eq.s32.totalorder %s22, 0
      %p83 = por %p81, %p82
      %p84 = scmp.ne.s32.totalorder %s70, %s71
      %p85 = scmp.eq.s32.totalorder %s23, 3
      %p86 = por %p84, %p85
      %p88 = scmp.ne.s32.totalorder %s71, %s87
      %p89 = scmp.eq.s32.totalorder %s23, 0
      %p90 = por %p88, %p89
      %s91 = ssub.s32 %s24, %s36
      %p92 = scmp.eq.s32.totalorder %s91, 0
      %s94 = sadd.s32 %s93, 1
      %s95 = scalar_select %p92, %s93, %s94
      %p98 = pneg %p92
      %p99 = scmp.eq.s32.totalorder %s17, 3
      %p100 = por %p98, %p99
      %p101 = scmp.ne.s32.totalorder %s93, %s96
      %p102 = scmp.eq.s32.totalorder %s17, 0
      %p103 = por %p101, %p102
      %p104 = scmp.ne.s32.totalorder %s93, %s96
      %p105 = scmp.eq.s32.totalorder %s22, 3
      %p106 = por %p104, %p105
      %p107 = scmp.ne.s32.totalorder %s96, %s97
      %p108 = scmp.eq.s32.totalorder %s22, 0
      %p109 = por %p107, %p108
      %p110 = scmp.ne.s32.totalorder %s96, %s97
      %p111 = scmp.eq.s32.totalorder %s23, 3
      %p112 = por %p110, %p111
      %p114 = scmp.ne.s32.totalorder %s97, %s113
      %p115 = scmp.eq.s32.totalorder %s23, 0
      %p116 = por %p114, %p115
      %p117 = scmp.le.s32.totalorder 1, %s17
      %p118 = scmp.lt.s32.totalorder %s17, 5
      %p119 = pnand %p117, %p118
      %p120 = pneg %p119
      // Predicated region
      $region9: #{tpu_custom_call.1} parent=5 // pred_check
        _
      $region10: #{tpu_custom_call.1} parent=5 // pred_check_branch
        %122 = sbr.rel (%p119) target = $region12
      $region11: #{tpu_custom_call.1} parent=5 // pred_region
        %s123 = ssub.s32 %s17, 1
      $region12: #{tpu_custom_call.1} parent=5 // pred_fallthru
        _
      %p124 = scmp.lt.s32.totalorder %s17, 4
      // Predicated region
      $region13: #{tpu_custom_call.1} parent=5 // pred_check
        %p125 = pneg %p124
      $region14: #{tpu_custom_call.1} parent=5 // pred_check_branch
        %127 = sbr.rel (%p125) target = $region16
      $region15: #{tpu_custom_call.1} parent=5 // pred_region
        // Predicated region
        $region17: #{tpu_custom_call.1} parent=15 // pred_check
          %p128 = pneg %p51
        $region18: #{tpu_custom_call.1} parent=15 // pred_check_branch
          %130 = sbr.rel (%p128) target = $region20
        $region19: #{tpu_custom_call.1} parent=15 // pred_region
          %s131 = sand.u32 %s41, 1
          %s132 = scalar_lea.sflag [#allocation3], %s131
          %s133 = sand.u32 %s41, 1
          %s134 = smul.addr %s133, 16
          %s135 = scalar_lea.vmem [#allocation2], %s134
          %s136 = smul.u32 2, %s25
          %138 = vsyncadd %s132, 0
          %s139 = smul.addr %s24, 4
          %s140 = sadd.s32 %s136, %s139
          %s141 = smul.addr %s140, 8
          %s142 = scalar_lea.hbm %s0, %s141
          %s144 = sshll.u32 %s142, 4
          %s145 = int_to_ptr.hbm [resolvable:$true] %s144
          %s146 = sshll.u32 %s135, 4
          %s147 = int_to_ptr.vmem [resolvable:$true] %s146
          %149 = dma.hbm_to_vmem [thread:$0]  %s145, 256, %s147, %s132
        $region20: #{tpu_custom_call.1} parent=15 // pred_fallthru
          _
        // Predicated region
        $region21: #{tpu_custom_call.1} parent=15 // pred_check
          %p150 = pneg %p77
        $region22: #{tpu_custom_call.1} parent=15 // pred_check_branch
          %152 = sbr.rel (%p150) target = $region24
        $region23: #{tpu_custom_call.1} parent=15 // pred_region
          %s153 = sand.u32 %s67, 1
          %s154 = scalar_lea.sflag [#allocation6], %s153
          %s155 = sand.u32 %s67, 1
          %s156 = smul.addr %s155, 16
          %s157 = scalar_lea.vmem [#allocation5], %s156
          %s158 = smul.u32 2, %s25
          %160 = vsyncadd %s154, 0
          %s161 = smul.addr %s158, 4
          %s162 = scalar_lea.hbm %s1, %s161
          %s163 = sshll.u32 %s162, 4
          %s164 = int_to_ptr.hbm [resolvable:$true] %s163
          %s165 = sshll.u32 %s157, 4
          %s166 = int_to_ptr.vmem [resolvable:$true] %s165
          %171 = dma.hbm_to_vmem [thread:$0]  %s164, 256, %s166, %s154, 256, 128, 8
        $region24: #{tpu_custom_call.1} parent=15 // pred_fallthru
          _
      $region16: #{tpu_custom_call.1} parent=5 // pred_fallthru
        _
      %p172 = scmp.le.s32.totalorder 1, %s17
      %p173 = scmp.lt.s32.totalorder %s17, 5
      %p174 = pnand %p172, %p173
      %p175 = pneg %p174
      // Predicated region
      $region25: #{tpu_custom_call.1} parent=5 // pred_check
        _
      $region26: #{tpu_custom_call.1} parent=5 // pred_check_branch
        %177 = sbr.rel (%p174) target = $region28
      $region27: #{tpu_custom_call.1} parent=5 // pred_region
        %s178 = ssub.s32 %s17, 1
        %s179 = sand.u32 %s44, 1
        %s180 = scalar_lea.sflag [#allocation3], %s179
        %s181 = sand.u32 %s44, 1
        %s182 = smul.addr %s181, 16
        %s183 = scalar_lea.vmem [#allocation2], %s182
        // Predicated region
        $region29: #{tpu_custom_call.1} parent=27 // pred_check
          %p184 = pneg %p57
        $region30: #{tpu_custom_call.1} parent=27 // pred_check_branch
          %186 = sbr.rel (%p184) target = $region32
        $region31: #{tpu_custom_call.1} parent=27 // pred_region
          %188 = dma.done %s180, 256
        $region32: #{tpu_custom_call.1} parent=27 // pred_fallthru
          _
        %s189 = sand.u32 %s70, 1
        %s190 = scalar_lea.sflag [#allocation6], %s189
        %s191 = sand.u32 %s70, 1
        %s192 = smul.addr %s191, 16
        %s193 = scalar_lea.vmem [#allocation5], %s192
        // Predicated region
        $region33: #{tpu_custom_call.1} parent=27 // pred_check
          %p194 = pneg %p83
        $region34: #{tpu_custom_call.1} parent=27 // pred_check_branch
          %196 = sbr.rel (%p194) target = $region36
        $region35: #{tpu_custom_call.1} parent=27 // pred_region
          %198 = dma.done %s190, 256
        $region36: #{tpu_custom_call.1} parent=27 // pred_fallthru
          _
        %s199 = sand.u32 %s44, 1
        %s200 = scalar_lea.sflag [#allocation3], %s199
        %s201 = sand.u32 %s44, 1
        %s202 = smul.addr %s201, 16
        %s203 = scalar_lea.vmem [#allocation2], %s202
        %p204 = pneg %p57
        %p205 = pneg %p54
        %s206 = sand.u32 %s70, 1
        %s207 = scalar_lea.sflag [#allocation6], %s206
        %s208 = sand.u32 %s70, 1
        %s209 = smul.addr %s208, 16
        %s210 = scalar_lea.vmem [#allocation5], %s209
        %p211 = pneg %p83
        %p212 = pneg %p80
        %p213 = pneg %p109
        %p214 = pneg %p106
        %s215 = sand.u32 %s96, 1
        %s216 = scalar_lea.sflag [#allocation4], %s215
        %s217 = sand.u32 %s96, 1
        %s218 = smul.addr %s217, 8
        %s219 = scalar_lea.vmem [#allocation7], %s218
        %s220 = smul.u32 2, %s27
        %s221 = smul.u32 2, %s27
        %v223 = vld [vmem:[%s183] sm:$0xff]
        %v224 = vld [vmem:[%s183 + $0x8] sm:$0xff]
        %v225 = vld [vmem:[%s193] sm:$0xff]
        %v226 = vld [vmem:[%s193 + $0x8] sm:$0x33]
        %v227 = vlaneseq
        %v228 = vand.u32 %v227, 127
        %v229 = vadd.s32 %v228, 128
        %s230 = smul.u32 %s27, 256
        %s231 = ssub.s32 500, %s230
        %v232 = vstv %s231
        %vm233 = vcmp.lt.s32.totalorder %v228, %v232
        %vm234 = vcmp.lt.s32.totalorder %v229, %v232
        %v235 = vsel %vm233, 1, 0
        %v236 = vsel %vm234, 1, 0
        %vm237 = vcmp.eq.s32.totalorder %v235, 1
        %vm238 = vcmp.eq.s32.totalorder %v236, 1
        %v239 = vsel %vm237, %v223, 0.0
        %v240 = vsel %vm238, %v224, 0.0
        %vm241 = vmpackc.low %vm238, %vm237
        %v242 = vsel %vm241, %v225, 0
        %v243 = vsel %vm241, %v226, 0
        %v244 = vpack.c.bf16 %v239, %v239
        %v245 = vpack.c.bf16 %v240, %v240
        %v248 = vunpack.c.l.b16 %v242
        %v249 = vunpack.c.h.b16 %v242
        %v250 = vunpack.c.l.b16 %v243
        %v251 = vunpack.c.h.b16 %v243
        %v252 = vpack.c.b16 %v250, %v248
        %v253 = vpack.c.b16 %v251, %v249
        %256 = vmatpush.bf16.xpose.msra.mxu0 0
        %257 = vmatpush.bf16.xpose.msra.mxu0 0
        %258 = vmatpush.bf16.xpose.msra.mxu0 0
        %259 = vmatpush.bf16.xpose.msra.mxu0 0
        %260 = vmatpush.bf16.xpose.msra.mxu0 0
        %261 = vmatpush.bf16.xpose.msra.mxu0 0
        %262 = vmatpush.bf16.xpose.msra.mxu0 0
        %263 = vmatpush.bf16.xpose.msra.mxu0 %v252
        %264 = vmatmul.bf16.gmra.mxu0 %v244
        %v265 = vpop.f32.mrf.mxu0
        %v266 = vadd.f32 0.0, %v265
        %v267 = vpop.f32.mrf.mxu0
        %268 = vdwg.mxu0
        %269 = vmatpush.bf16.xpose.msra.mxu0 0
        %270 = vmatpush.bf16.xpose.msra.mxu0 0
        %271 = vmatpush.bf16.xpose.msra.mxu0 0
        %272 = vmatpush.bf16.xpose.msra.mxu0 0
        %273 = vmatpush.bf16.xpose.msra.mxu0 0
        %274 = vmatpush.bf16.xpose.msra.mxu0 0
        %275 = vmatpush.bf16.xpose.msra.mxu0 0
        %276 = vmatpush.bf16.xpose.msra.mxu0 %v253
        %277 = vmatmul.bf16.gmra.mxu0 %v245
        %v278 = vpop.f32.mrf.mxu0
        %v279 = vadd.f32 %v266, %v278
        %v280 = vpop.f32.mrf.mxu0
        %281 = vdwg.mxu0
        %p282 = scmp.eq.s32.totalorder %s27, 0
        // Predicated region
        $region37: #{tpu_custom_call.1} parent=27 // pred_check
          %p283 = pneg %p282
        $region38: #{tpu_custom_call.1} parent=27 // pred_check_branch
          %285 = sbr.rel (%p283) target = $region40
        $region39: #{tpu_custom_call.1} parent=27 // pred_region
          %vm286 = vcmask 97280
          %287 = vst.msk [vmem:[%s219] sm:$0xff] %vm286, 0.0
        $region40: #{tpu_custom_call.1} parent=27 // pred_fallthru
          _
        %v288 = vld [vmem:[%s219] sm:$0xff]
        %v289 = vadd.f32 %v288, %v279
        %vm290 = vcmask 97280
        %291 = vst.msk [vmem:[%s219] sm:$0xff] %vm290, %v289
        %s292 = sand.u32 %s96, 1
        %s293 = scalar_lea.sflag [#allocation4], %s292
        %s294 = sand.u32 %s96, 1
        %s295 = smul.addr %s294, 8
        %s296 = scalar_lea.vmem [#allocation7], %s295
        // Predicated region
        $region41: #{tpu_custom_call.1} parent=27 // pred_check
          %p297 = pneg %p106
        $region42: #{tpu_custom_call.1} parent=27 // pred_check_branch
          %299 = sbr.rel (%p297) target = $region44
        $region43: #{tpu_custom_call.1} parent=27 // pred_region
          %301 = vsyncadd %s293, 0
          %s302 = smul.addr %s26, 8
          %s303 = scalar_lea.hbm %s2, %s302
          %s305 = sshll.u32 %s296, 4
          %s306 = int_to_ptr.vmem [resolvable:$true] %s305
          %s307 = sshll.u32 %s303, 4
          %s308 = int_to_ptr.hbm [resolvable:$true] %s307
          %310 = dma.vmem_to_hbm [thread:$0]  %s306, 128, %s308, %s293
        $region44: #{tpu_custom_call.1} parent=27 // pred_fallthru
          _
      $region28: #{tpu_custom_call.1} parent=5 // pred_fallthru
        _
      %p311 = scmp.le.s32.totalorder 2, %s17
      // Predicated region
      $region45: #{tpu_custom_call.1} parent=5 // pred_check
        %p312 = pneg %p311
      $region46: #{tpu_custom_call.1} parent=5 // pred_check_branch
        %314 = sbr.rel (%p312) target = $region48
      $region47: #{tpu_custom_call.1} parent=5 // pred_region
        %s315 = ssub.s32 %s17, 2
        // Predicated region
        $region49: #{tpu_custom_call.1} parent=47 // pred_check
          %p316 = pneg %p112
        $region50: #{tpu_custom_call.1} parent=47 // pred_check_branch
          %318 = sbr.rel (%p316) target = $region52
        $region51: #{tpu_custom_call.1} parent=47 // pred_region
          %s319 = sand.u32 %s97, 1
          %s320 = scalar_lea.sflag [#allocation4], %s319
          %s321 = sand.u32 %s97, 1
          %s322 = smul.addr %s321, 8
          %s323 = scalar_lea.vmem [#allocation7], %s322
          %325 = dma.done %s320, 128
        $region52: #{tpu_custom_call.1} parent=47 // pred_fallthru
          _
      $region48: #{tpu_custom_call.1} parent=5 // pred_fallthru
        _
    $region6: #{tpu_custom_call.1} parent=1 // loop_footer
      %s21 = sadd.s32 1, %s17
    $region7: #{tpu_custom_call.1} parent=1 // loop_footer_branch
      %16 = sbr.rel target = $region3
    $region8: #{tpu_custom_call.1} parent=1 // loop_exit
      _
    %326 = vsyncpa [#allocation3], 1
    %s327 = scalar_lea.sflag [#allocation3], 1
    %328 = vsyncpa %s327, 1
    %329 = vsyncpa [#allocation6], 1
    %s330 = scalar_lea.sflag [#allocation6], 1
    %331 = vsyncpa %s330, 1
    %332 = vsyncpa [#allocation4], 1
    %s333 = scalar_lea.sflag [#allocation4], 1
    %334 = vsyncpa %s333, 1

</llo_original>
